<compile_context>
chip_gen: v5e
topology: v5e:2x2
jax: 0.10.0
libtpu: 0.0.40
codegen_flags: <defaults>
</compile_context>

<pallas_src>
import functools

import jax
import jax.numpy as jnp
from jax.experimental import pallas as pl
from jax.experimental.pallas import tpu as pltpu


LANE = 128
SUBLANE = 8


def _round_up(x, m):
    return ((x + m - 1) // m) * m


def _classifier_kernel(x_ref, w1_ref, t1_ref, w2_ref, t2_ref, w3_ref, b3_ref,
                       o_ref):
    x = x_ref[...]                                    # (TILE_B, F) bf16

    # Linear 1 (+ folded BN1) + ReLU -- f32 accumulation on the MXU.
    h = jnp.dot(x, w1_ref[...], preferred_element_type=jnp.float32)
    h = jnp.maximum(h + t1_ref[...], 0.0)

    # Linear 2 (+ folded BN2) + ReLU.
    h = jnp.dot(h.astype(w2_ref.dtype), w2_ref[...],
                preferred_element_type=jnp.float32)
    h = jnp.maximum(h + t2_ref[...], 0.0)

    # Classifier head (columns padded to a lane-dense width with zeros).
    y = jnp.dot(h.astype(w3_ref.dtype), w3_ref[...],
                preferred_element_type=jnp.float32) + b3_ref[...]

    # F.normalize(y, dim=1): y / max(||y||_2, 1e-12) == y * rsqrt(max(ssq, 1e-24))
    ssq = jnp.sum(y * y, axis=1, keepdims=True)
    o_ref[...] = y * jax.lax.rsqrt(jnp.maximum(ssq, 1e-24))


def fold_params(raw, compute_dtype=jnp.bfloat16):
    """Fold eval-mode BatchNorm into the Linears; pad the head to 128 lanes."""
    eps = 1e-5

    def fold(w, b, gamma, beta, mean, var):
        scale = gamma / jnp.sqrt(var + eps)            # (1, out)
        shift = beta - mean * scale                    # (1, out)
        wf = (w * scale).astype(compute_dtype)         # (in, out)
        tf = (b * scale + shift).astype(jnp.float32)   # (1, out)
        return wf, tf

    w1, t1 = fold(raw["w1"], raw["b1"], raw["g1"], raw["be1"], raw["m1"], raw["v1"])
    w2, t2 = fold(raw["w2"], raw["b2"], raw["g2"], raw["be2"], raw["m2"], raw["v2"])

    num_classes = raw["w3"].shape[1]
    cp = _round_up(num_classes, LANE)
    w3 = jnp.zeros((raw["w3"].shape[0], cp), jnp.float32).at[:, :num_classes].set(raw["w3"])
    b3 = jnp.zeros((1, cp), jnp.float32).at[:, :num_classes].set(raw["b3"])

    return dict(w1=w1, t1=t1, w2=w2, t2=t2,
                w3=w3.astype(compute_dtype), b3=b3,
                num_classes=num_classes)


@functools.partial(jax.jit, static_argnames=("num_classes", "tile_b"))
def _forward(x, w1, t1, w2, t2, w3, b3, *, num_classes, tile_b):
    B, feature_dim = x.shape
    cp = w3.shape[1]
    compute_dtype = w1.dtype

    xb = x.astype(compute_dtype)

    # Sublane-friendly batch tile; pad the batch to a multiple of it.
    tb = min(tile_b, _round_up(B, SUBLANE))
    bp = _round_up(B, tb)
    if bp != B:
        xb = jnp.pad(xb, ((0, bp - B), (0, 0)))

    weight_args = (w1, t1, w2, t2, w3, b3)

    out = pl.pallas_call(
        _classifier_kernel,
        out_shape=jax.ShapeDtypeStruct((bp, cp), jnp.float32),
        grid=(bp // tb,),
        in_specs=[pl.BlockSpec((tb, feature_dim), lambda i: (i, 0))]
                 + [pl.BlockSpec(a.shape, lambda i: (0, 0)) for a in weight_args],
        out_specs=pl.BlockSpec((tb, cp), lambda i: (i, 0)),
        compiler_params=pltpu.CompilerParams(
            dimension_semantics=("parallel",),      # shard batch across TCs (v7x)
            vmem_limit_bytes=32 * 1024 * 1024,      # safe on v5e/v6e/v7x
        ),
    )(xb, *weight_args)

    return out[:B, :num_classes]


def evaluation_wrapper_forward(x, folded, tile_b=256):
    """x: (B, feature_dim) f32.  Returns (B, num_classes) f32, rows unit-norm."""
    return _forward(x, folded["w1"], folded["t1"], folded["w2"], folded["t2"],
                    folded["w3"], folded["b3"],
                    num_classes=folded["num_classes"], tile_b=tile_b)


def init_params(key, feature_dim, hidden_dim, num_classes, dtype=jnp.float32):
    """Synthetic params mirroring the PyTorch module (eval-mode BN stats)."""
    keys = jax.random.split(key, 6)

    def linear(kw, kb, fan_in, fan_out):
        bound = 1.0 / jnp.sqrt(fan_in)
        w = jax.random.uniform(kw, (fan_in, fan_out), dtype, -bound, bound)
        b = jax.random.uniform(kb, (1, fan_out), dtype, -bound, bound)
        return w, b

    w1, b1 = linear(keys[0], keys[1], feature_dim, hidden_dim)
    w2, b2 = linear(keys[2], keys[3], hidden_dim, hidden_dim)
    w3, b3 = linear(keys[4], keys[5], hidden_dim, num_classes)

    def bn(dim):
        return (jnp.ones((1, dim), dtype), jnp.zeros((1, dim), dtype),
                jnp.zeros((1, dim), dtype), jnp.ones((1, dim), dtype))

    g1, be1, m1, v1 = bn(hidden_dim)
    g2, be2, m2, v2 = bn(hidden_dim)

    # TODO(synk): PyTorch BatchNorm1d in train mode uses batch statistics; this
    # kernel implements eval-mode BN (running stats) folded into the Linears.
    return dict(w1=w1, b1=b1, g1=g1, be1=be1, m1=m1, v1=v1,
                w2=w2, b2=b2, g2=g2, be2=be2, m2=m2, v2=v2,
                w3=w3, b3=b3)


def _reference(x, folded):
    """Pure-JAX reference with the same bf16-input / f32-accum math."""
    cd = folded["w1"].dtype
    h = jnp.dot(x.astype(cd), folded["w1"], preferred_element_type=jnp.float32)
    h = jnp.maximum(h + folded["t1"], 0.0)
    h = jnp.dot(h.astype(cd), folded["w2"], preferred_element_type=jnp.float32)
    h = jnp.maximum(h + folded["t2"], 0.0)
    y = jnp.dot(h.astype(cd), folded["w3"],
                preferred_element_type=jnp.float32) + folded["b3"]
    y = y[:, :folded["num_classes"]]
    nrm = jnp.sqrt(jnp.sum(y * y, axis=1, keepdims=True))
    return y / jnp.maximum(nrm, 1e-12)


if __name__ == "__main__":
    feature_dim, hidden_dim, num_classes = 32, 32, 16
    batch = 8

    key = jax.random.PRNGKey(0)
    k_in, k_params = jax.random.split(key)

    x = jax.random.normal(k_in, (batch, feature_dim), dtype=jnp.float32)
    raw = init_params(k_params, feature_dim, hidden_dim, num_classes)
    folded = fold_params(raw)

    out = evaluation_wrapper_forward(x, folded)
    out = jax.block_until_ready(out)

    assert out.shape == (batch, num_classes)

    # Rows must be unit-norm (F.normalize semantics).
    row_norms = jnp.sqrt(jnp.sum(out * out, axis=1))
    assert bool(jnp.all(jnp.abs(row_norms - 1.0) < 1e-3)), row_norms

    # Match the pure-JAX reference built with identical precision choices.
    ref = _reference(x, folded)
    assert bool(jnp.all(jnp.abs(out - ref) < 2e-2))

    print("KERNEL_OK")
</pallas_src>

<mosaic_0001>
module attributes {stable_mosaic.version = 11 : i64} {
  func.func @_classifier_kernel(%arg0: i32, %arg1: memref<8x32xbf16, #tpu.memory_space<vmem>>, %arg2: memref<32x32xbf16, #tpu.memory_space<vmem>>, %arg3: memref<1x32xf32, #tpu.memory_space<vmem>>, %arg4: memref<32x32xbf16, #tpu.memory_space<vmem>>, %arg5: memref<1x32xf32, #tpu.memory_space<vmem>>, %arg6: memref<32x128xbf16, #tpu.memory_space<vmem>>, %arg7: memref<1x128xf32, #tpu.memory_space<vmem>>, %arg8: memref<8x128xf32, #tpu.memory_space<vmem>>) attributes {dimension_semantics = [#tpu.dimension_semantics<parallel>], iteration_bounds = array<i64: 1>, scalar_prefetch = 0 : i64, scratch_operands = 0 : i64, tpu.core_type = #tpu.core_type<tc>, window_params = [{transform_indices = @transform_0, window_bounds = array<i64: 8, 32>}, {pipeline_mode = #tpu.pipeline_mode<synchronous>, transform_indices = @transform_1, window_bounds = array<i64: 32, 32>}, {pipeline_mode = #tpu.pipeline_mode<synchronous>, transform_indices = @transform_2, window_bounds = array<i64: 1, 32>}, {pipeline_mode = #tpu.pipeline_mode<synchronous>, transform_indices = @transform_3, window_bounds = array<i64: 32, 32>}, {pipeline_mode = #tpu.pipeline_mode<synchronous>, transform_indices = @transform_4, window_bounds = array<i64: 1, 32>}, {pipeline_mode = #tpu.pipeline_mode<synchronous>, transform_indices = @transform_5, window_bounds = array<i64: 32, 128>}, {pipeline_mode = #tpu.pipeline_mode<synchronous>, transform_indices = @transform_6, window_bounds = array<i64: 1, 128>}, {transform_indices = @transform_7, window_bounds = array<i64: 8, 128>}]} {
    %c0 = arith.constant 0 : index
    %c0_0 = arith.constant 0 : index
    %0 = vector.load %arg1[%c0, %c0_0] : memref<8x32xbf16, #tpu.memory_space<vmem>>, vector<8x32xbf16>
    %c0_1 = arith.constant 0 : index
    %c0_2 = arith.constant 0 : index
    %1 = vector.load %arg2[%c0_1, %c0_2] : memref<32x32xbf16, #tpu.memory_space<vmem>>, vector<32x32xbf16>
    %cst = arith.constant dense<0.000000e+00> : vector<8x32xf32>
    %2 = tpu.matmul %0, %1, %cst {dimension_numbers = #tpu.dot_dimension_numbers<[1], [0], [0], [1], [0, 0, 1, 1], [], []>} : vector<8x32xbf16>, vector<32x32xbf16>, vector<8x32xf32> -> vector<8x32xf32>
    %c0_3 = arith.constant 0 : index
    %c0_4 = arith.constant 0 : index
    %3 = vector.load %arg3[%c0_3, %c0_4] : memref<1x32xf32, #tpu.memory_space<vmem>>, vector<1x32xf32>
    %4 = vector.broadcast %3 : vector<1x32xf32> to vector<8x32xf32>
    %5 = arith.addf %2, %4 : vector<8x32xf32>
    %cst_5 = arith.constant 0.000000e+00 : f32
    %6 = vector.broadcast %cst_5 : f32 to vector<8x32xf32>
    %7 = arith.maximumf %5, %6 : vector<8x32xf32>
    %8 = arith.truncf %7 : vector<8x32xf32> to vector<8x32xbf16>
    %c0_6 = arith.constant 0 : index
    %c0_7 = arith.constant 0 : index
    %9 = vector.load %arg4[%c0_6, %c0_7] : memref<32x32xbf16, #tpu.memory_space<vmem>>, vector<32x32xbf16>
    %cst_8 = arith.constant dense<0.000000e+00> : vector<8x32xf32>
    %10 = tpu.matmul %8, %9, %cst_8 {dimension_numbers = #tpu.dot_dimension_numbers<[1], [0], [0], [1], [0, 0, 1, 1], [], []>} : vector<8x32xbf16>, vector<32x32xbf16>, vector<8x32xf32> -> vector<8x32xf32>
    %c0_9 = arith.constant 0 : index
    %c0_10 = arith.constant 0 : index
    %11 = vector.load %arg5[%c0_9, %c0_10] : memref<1x32xf32, #tpu.memory_space<vmem>>, vector<1x32xf32>
    %12 = vector.broadcast %11 : vector<1x32xf32> to vector<8x32xf32>
    %13 = arith.addf %10, %12 : vector<8x32xf32>
    %cst_11 = arith.constant 0.000000e+00 : f32
    %14 = vector.broadcast %cst_11 : f32 to vector<8x32xf32>
    %15 = arith.maximumf %13, %14 : vector<8x32xf32>
    %16 = arith.truncf %15 : vector<8x32xf32> to vector<8x32xbf16>
    %c0_12 = arith.constant 0 : index
    %c0_13 = arith.constant 0 : index
    %17 = vector.load %arg6[%c0_12, %c0_13] : memref<32x128xbf16, #tpu.memory_space<vmem>>, vector<32x128xbf16>
    %cst_14 = arith.constant dense<0.000000e+00> : vector<8x128xf32>
    %18 = tpu.matmul %16, %17, %cst_14 {dimension_numbers = #tpu.dot_dimension_numbers<[1], [0], [0], [1], [0, 0, 1, 1], [], []>} : vector<8x32xbf16>, vector<32x128xbf16>, vector<8x128xf32> -> vector<8x128xf32>
    %c0_15 = arith.constant 0 : index
    %c0_16 = arith.constant 0 : index
    %19 = vector.load %arg7[%c0_15, %c0_16] : memref<1x128xf32, #tpu.memory_space<vmem>>, vector<1x128xf32>
    %20 = vector.broadcast %19 : vector<1x128xf32> to vector<8x128xf32>
    %21 = arith.addf %18, %20 : vector<8x128xf32>
    %22 = arith.mulf %21, %21 : vector<8x128xf32>
    %cst_17 = arith.constant dense<0.000000e+00> : vector<8xf32>
    %23 = vector.multi_reduction <add>, %22, %cst_17 [1] : vector<8x128xf32> to vector<8xf32>
    %24 = vector.shape_cast %23 : vector<8xf32> to vector<8x1xf32>
    %cst_18 = arith.constant 1.000000e-24 : f32
    %25 = vector.broadcast %cst_18 : f32 to vector<8x1xf32>
    %26 = arith.maximumf %24, %25 : vector<8x1xf32>
    %27 = math.rsqrt %26 : vector<8x1xf32>
    %28 = vector.broadcast %27 : vector<8x1xf32> to vector<8x128xf32>
    %29 = arith.mulf %21, %28 : vector<8x128xf32>
    %c0_19 = arith.constant 0 : index
    %c0_20 = arith.constant 0 : index
    %30 = vector.load %arg8[%c0_19, %c0_20] : memref<8x128xf32, #tpu.memory_space<vmem>>, vector<8x128xf32>
    tpu.vector_store %arg8[%c0_19, %c0_20], %29 {strides = array<i32>} : memref<8x128xf32, #tpu.memory_space<vmem>>, vector<8x128xf32>,
    return
  }
  func.func @transform_0(%arg0: i32) -> (i32, i32) {
    %c0_i32 = arith.constant 0 : i32
    %c0_i32_0 = arith.constant 0 : i32
    return %arg0, %c0_i32 : i32, i32
  }
  func.func @transform_1(%arg0: i32) -> (i32, i32) {
    %c0_i32 = arith.constant 0 : i32
    %c0_i32_0 = arith.constant 0 : i32
    %c0_i32_1 = arith.constant 0 : i32
    return %c0_i32, %c0_i32_0 : i32, i32
  }
  func.func @transform_2(%arg0: i32) -> (i32, i32) {
    %c0_i32 = arith.constant 0 : i32
    %c0_i32_0 = arith.constant 0 : i32
    %c0_i32_1 = arith.constant 0 : i32
    return %c0_i32, %c0_i32_0 : i32, i32
  }
  func.func @transform_3(%arg0: i32) -> (i32, i32) {
    %c0_i32 = arith.constant 0 : i32
    %c0_i32_0 = arith.constant 0 : i32
    %c0_i32_1 = arith.constant 0 : i32
    return %c0_i32, %c0_i32_0 : i32, i32
  }
  func.func @transform_4(%arg0: i32) -> (i32, i32) {
    %c0_i32 = arith.constant 0 : i32
    %c0_i32_0 = arith.constant 0 : i32
    %c0_i32_1 = arith.constant 0 : i32
    return %c0_i32, %c0_i32_0 : i32, i32
  }
  func.func @transform_5(%arg0: i32) -> (i32, i32) {
    %c0_i32 = arith.constant 0 : i32
    %c0_i32_0 = arith.constant 0 : i32
    %c0_i32_1 = arith.constant 0 : i32
    return %c0_i32, %c0_i32_0 : i32, i32
  }
  func.func @transform_6(%arg0: i32) -> (i32, i32) {
    %c0_i32 = arith.constant 0 : i32
    %c0_i32_0 = arith.constant 0 : i32
    %c0_i32_1 = arith.constant 0 : i32
    return %c0_i32, %c0_i32_0 : i32, i32
  }
  func.func @transform_7(%arg0: i32) -> (i32, i32) {
    %c0_i32 = arith.constant 0 : i32
    %c0_i32_0 = arith.constant 0 : i32
    return %arg0, %c0_i32 : i32, i32
  }
}

</mosaic_0001>

<llo_original>
// kernel: _forward.1
$region0: #{_forward.1}
  #allocation0 [shape = 'u32[]', space=smem, size = 0x4, offset = 0x4, fixed_abs, tag = 'smem constant byte address 0x4 - core index']
  #allocation1 [shape = 'u32[72,128]{1,0:T(1,128)}', space=vmem, size = 0x9000, scoped, tag = 'internal scratch']
  %s0 = inlined_call_operand.vmem [shape: bf16[8,32], index: 0, kind: input, shape index: {}]
  %s1 = inlined_call_operand.hbm [shape: bf16[32,32], index: 1, kind: input, shape index: {}]
  %s2 = inlined_call_operand.hbm [shape: f32[1,32], index: 2, kind: input, shape index: {}]
  %s3 = inlined_call_operand.hbm [shape: bf16[32,32], index: 3, kind: input, shape index: {}]
  %s4 = inlined_call_operand.hbm [shape: f32[1,32], index: 4, kind: input, shape index: {}]
  %s5 = inlined_call_operand.vmem [shape: bf16[32,128], index: 5, kind: input, shape index: {}]
  %s6 = inlined_call_operand.vmem [shape: f32[1,128], index: 6, kind: input, shape index: {}]
  %s7 = inlined_call_operand.hbm [shape: f32[8,128], index: 7, kind: output, shape index: {}]
  %s8 = sld [smem:[#allocation0]]
  $region54: #{_forward.1} parent=0
    _
  %s10 = ssub.s32 1, %s8
  %s11 = scalar_select 0, %s10, %s8
  $region1: #{_forward.1} parent=0
    #allocation2 [shape = 'u8[8192]{0}', space=vmem, size = 0x2000, scoped, tag = 'input window, operand 1, single buffered']
    #allocation3 [shape = 's32[1]{0}', space=sflag, size = 0x4, scoped, tag = 'scoped memory for _forward.1']
    #allocation4 [shape = 's32[1]{0}', space=sflag, size = 0x4, scoped, tag = 'scoped memory for _forward.1']
    #allocation5 [shape = 'u8[512]{0}', space=vmem, size = 0x400, scoped, tag = 'input window, operand 2, single buffered']
    #allocation6 [shape = 's32[1]{0}', space=sflag, size = 0x4, scoped, tag = 'scoped memory for _forward.1']
    #allocation7 [shape = 'u8[8192]{0}', space=vmem, size = 0x2000, scoped, tag = 'input window, operand 3, single buffered']
    #allocation8 [shape = 'u8[512]{0}', space=vmem, size = 0x400, scoped, tag = 'input window, operand 4, single buffered']
    #allocation9 [shape = 's32[1]{0}', space=sflag, size = 0x4, scoped, tag = 'scoped memory for _forward.1']
    #allocation10 [shape = 'u8[4096]{0}', space=vmem, size = 0x1000, scoped, tag = 'output window, operand 0, single buffered']
    %12 = vsyncpa [#allocation3], 0
    %13 = vsyncpa [#allocation6], 0
    %14 = vsyncpa [#allocation9], 0
    %15 = vsyncpa [#allocation4], 0
    // Predicated region
    $region2: #{_forward.1} parent=1 // pred_check
      _
    $region3: #{_forward.1} parent=1 // pred_check_branch
      %17 = sbr.rel (0) target = $region5
    $region4: #{_forward.1} parent=1 // pred_region
      _
    $region5: #{_forward.1} parent=1 // pred_fallthru
      _
    // Predicated region
    $region6: #{_forward.1} parent=1 // pred_check
      _
    $region7: #{_forward.1} parent=1 // pred_check_branch
      %19 = sbr.rel (0) target = $region9
    $region8: #{_forward.1} parent=1 // pred_region
      %21 = vsyncadd [#allocation3], 0
      %s22 = sshll.u32 %s1, 4
      %s23 = int_to_ptr.hbm [resolvable:$true] %s22
      %s24 = sshll.u32 [#allocation2], 4
      %s25 = int_to_ptr.vmem [resolvable:$true] %s24
      %30 = dma.hbm_to_vmem [thread:$0]  %s23, 256, %s25, [#allocation3], 64, 64, 4
    $region9: #{_forward.1} parent=1 // pred_fallthru
      _
    // Predicated region
    $region10: #{_forward.1} parent=1 // pred_check
      _
    $region11: #{_forward.1} parent=1 // pred_check_branch
      %32 = sbr.rel (0) target = $region13
    $region12: #{_forward.1} parent=1 // pred_region
      %34 = vsyncadd [#allocation6], 0
      %s36 = sshll.u32 %s2, 4
      %s37 = int_to_ptr.hbm [resolvable:$true] %s36
      %s38 = sshll.u32 [#allocation5], 4
      %s39 = int_to_ptr.vmem [resolvable:$true] %s38
      %41 = dma.hbm_to_vmem [thread:$0]  %s37, 16, %s39, [#allocation6]
    $region13: #{_forward.1} parent=1 // pred_fallthru
      _
    // Predicated region
    $region14: #{_forward.1} parent=1 // pred_check
      _
    $region15: #{_forward.1} parent=1 // pred_check_branch
      %43 = sbr.rel (0) target = $region17
    $region16: #{_forward.1} parent=1 // pred_region
      %45 = vsyncadd [#allocation6], 0
      %s46 = sshll.u32 %s3, 4
      %s47 = int_to_ptr.hbm [resolvable:$true] %s46
      %s48 = sshll.u32 [#allocation7], 4
      %s49 = int_to_ptr.vmem [resolvable:$true] %s48
      %54 = dma.hbm_to_vmem [thread:$0]  %s47, 256, %s49, [#allocation6], 64, 64, 4
    $region17: #{_forward.1} parent=1 // pred_fallthru
      _
    // Predicated region
    $region18: #{_forward.1} parent=1 // pred_check
      _
    $region19: #{_forward.1} parent=1 // pred_check_branch
      %56 = sbr.rel (0) target = $region21
    $region20: #{_forward.1} parent=1 // pred_region
      %58 = vsyncadd [#allocation9], 0
      %s60 = sshll.u32 %s4, 4
      %s61 = int_to_ptr.hbm [resolvable:$true] %s60
      %s62 = sshll.u32 [#allocation8], 4
      %s63 = int_to_ptr.vmem [resolvable:$true] %s62
      %65 = dma.hbm_to_vmem [thread:$0]  %s61, 16, %s63, [#allocation9]
    $region21: #{_forward.1} parent=1 // pred_fallthru
      _
    // Predicated region
    $region22: #{_forward.1} parent=1 // pred_check
      _
    $region23: #{_forward.1} parent=1 // pred_check_branch
      %67 = sbr.rel (0) target = $region25
    $region24: #{_forward.1} parent=1 // pred_region
      _
    $region25: #{_forward.1} parent=1 // pred_fallthru
      _
    // Predicated region
    $region26: #{_forward.1} parent=1 // pred_check
      _
    $region27: #{_forward.1} parent=1 // pred_check_branch
      %69 = sbr.rel (0) target = $region29
    $region28: #{_forward.1} parent=1 // pred_region
      _
    $region29: #{_forward.1} parent=1 // pred_fallthru
      _
    // Predicated region
    $region30: #{_forward.1} parent=1 // pred_check
      _
    $region31: #{_forward.1} parent=1 // pred_check_branch
      %71 = sbr.rel (0) target = $region33
    $region32: #{_forward.1} parent=1 // pred_region
      %73 = dma.done [#allocation3], 256
    $region33: #{_forward.1} parent=1 // pred_fallthru
      _
    // Predicated region
    $region34: #{_forward.1} parent=1 // pred_check
      _
    $region35: #{_forward.1} parent=1 // pred_check_branch
      %75 = sbr.rel (0) target = $region37
    $region36: #{_forward.1} parent=1 // pred_region
      %77 = dma.done [#allocation6], 16
    $region37: #{_forward.1} parent=1 // pred_fallthru
      _
    // Predicated region
    $region38: #{_forward.1} parent=1 // pred_check
      _
    $region39: #{_forward.1} parent=1 // pred_check_branch
      %79 = sbr.rel (0) target = $region41
    $region40: #{_forward.1} parent=1 // pred_region
      %81 = dma.done [#allocation6], 256
    $region41: #{_forward.1} parent=1 // pred_fallthru
      _
    // Predicated region
    $region42: #{_forward.1} parent=1 // pred_check
      _
    $region43: #{_forward.1} parent=1 // pred_check_branch
      %83 = sbr.rel (0) target = $region45
    $region44: #{_forward.1} parent=1 // pred_region
      %85 = dma.done [#allocation9], 16
    $region45: #{_forward.1} parent=1 // pred_fallthru
      _
    %v87 = vld [vmem:[%s0] sm:$0xf]
    %v88 = vld [vmem:[#allocation2] sm:$0xf]
    %v89 = vld [vmem:[#allocation2 + $0x4] sm:$0xf]
    %v90 = vld [vmem:[#allocation2 + $0x8] sm:$0xf]
    %v91 = vld [vmem:[#allocation2 + $0xc] sm:$0xf]
    %v92 = vld [vmem:[#allocation5] sm:$0x1]
    %v94 = vperm.slane %v92, 0
    %v100 = vunpack.c.l.b16 %v88
    %v101 = vunpack.c.l.b16 %v89
    %v102 = vunpack.c.l.b16 %v90
    %v103 = vunpack.c.l.b16 %v91
    %v104 = vpack.c.b16 %v101, %v100
    %v105 = vpack.c.b16 %v103, %v102
    %vm108 = vcmask 261120
    %v110 = vsel %vm108, %v87, 0
    %112 = vmatpush.bf16.msra.mxu0 0
    %113 = vmatpush.bf16.msra.mxu0 0
    %114 = vmatpush.bf16.msra.mxu0 0
    %115 = vmatpush.bf16.msra.mxu0 0
    %116 = vmatpush.bf16.msra.mxu0 0
    %117 = vmatpush.bf16.msra.mxu0 0
    %118 = vmatpush.bf16.msra.mxu0 %v105
    %119 = vmatpush.bf16.msra.mxu0 %v104
    %120 = vmatmul.bf16.gmra.mxu0 %v110
    %v121 = vpop.f32.mrf.mxu0
    %v122 = vadd.f32 %v94, %v121
    %v123 = vpop.f32.mrf.mxu0
    %124 = vdwg.mxu0
    %v125 = vmax.f32 %v122, 0.0
    %v126 = vpack.c.bf16 %v125, %v125
    %v127 = vld [vmem:[#allocation7] sm:$0xf]
    %v128 = vld [vmem:[#allocation7 + $0x4] sm:$0xf]
    %v129 = vld [vmem:[#allocation7 + $0x8] sm:$0xf]
    %v130 = vld [vmem:[#allocation7 + $0xc] sm:$0xf]
    %v131 = vld [vmem:[#allocation8] sm:$0x1]
    %v133 = vperm.slane %v131, 0
    %v139 = vunpack.c.l.b16 %v127
    %v140 = vunpack.c.l.b16 %v128
    %v141 = vunpack.c.l.b16 %v129
    %v142 = vunpack.c.l.b16 %v130
    %v143 = vpack.c.b16 %v140, %v139
    %v144 = vpack.c.b16 %v142, %v141
    %v148 = vsel %vm108, %v126, 0
    %150 = vmatpush.bf16.msra.mxu0 0
    %151 = vmatpush.bf16.msra.mxu0 0
    %152 = vmatpush.bf16.msra.mxu0 0
    %153 = vmatpush.bf16.msra.mxu0 0
    %154 = vmatpush.bf16.msra.mxu0 0
    %155 = vmatpush.bf16.msra.mxu0 0
    %156 = vmatpush.bf16.msra.mxu0 %v144
    %157 = vmatpush.bf16.msra.mxu0 %v143
    %158 = vmatmul.bf16.gmra.mxu0 %v148
    %v159 = vpop.f32.mrf.mxu0
    %v160 = vadd.f32 %v133, %v159
    %v161 = vpop.f32.mrf.mxu0
    %162 = vdwg.mxu0
    %v163 = vmax.f32 %v160, 0.0
    %v164 = vpack.c.bf16 %v163, %v163
    %v165 = vld [vmem:[%s5] sm:$0xf]
    %v166 = vld [vmem:[%s5 + $0x4] sm:$0xf]
    %v167 = vld [vmem:[%s5 + $0x8] sm:$0xf]
    %v168 = vld [vmem:[%s5 + $0xc] sm:$0xf]
    %v169 = vld [vmem:[%s6] sm:$0x1]
    %v171 = vperm.slane %v169, 0
    %v177 = vunpack.c.l.b16 %v165
    %v178 = vunpack.c.l.b16 %v166
    %v179 = vunpack.c.l.b16 %v167
    %v180 = vunpack.c.l.b16 %v168
    %v181 = vpack.c.b16 %v178, %v177
    %v182 = vpack.c.b16 %v180, %v179
    %v186 = vsel %vm108, %v164, 0
    %188 = vmatpush.bf16.msra.mxu0 0
    %189 = vmatpush.bf16.msra.mxu0 0
    %190 = vmatpush.bf16.msra.mxu0 0
    %191 = vmatpush.bf16.msra.mxu0 0
    %192 = vmatpush.bf16.msra.mxu0 0
    %193 = vmatpush.bf16.msra.mxu0 0
    %194 = vmatpush.bf16.msra.mxu0 %v182
    %195 = vmatpush.bf16.msra.mxu0 %v181
    %196 = vmatmul.bf16.gmra.mxu0 %v186
    %v197 = vpop.f32.mrf.mxu0
    %v198 = vadd.f32 %v171, %v197
    %v199 = vpop.f32.mrf.mxu0
    %200 = vdwg.mxu0
    %v201 = vmul.f32 %v198, %v198
    %202 = vadd.xlane.f32.xlu0 %v201
    %v203 = vpop.xlane.xlu0 %202
    %v204 = vmax.f32 %v203, 1e-24
    %v205 = vrsqrt.pop %v204
    %v206 = vmul.f32 %v205, %v204
    %v207 = vmul.f32 %v206, %v205
    %v208 = vmul.f32 0.5, %v207
    %v209 = vsub.f32 1.5, %v208
    %v210 = vmul.f32 %v205, %v209
    %vm211 = vweird.f32 %v204
    %vm212 = vweird.f32 %v205
    %vm213 = vmor %vm211, %vm212
    %v214 = vsel %vm213, %v205, %v210
    %v215 = vmul.f32 %v198, %v214
    %216 = vst [vmem:[#allocation10] sm:$0xff] %v215
    // Predicated region
    $region46: #{_forward.1} parent=1 // pred_check
      _
    $region47: #{_forward.1} parent=1 // pred_check_branch
      %218 = sbr.rel (0) target = $region49
    $region48: #{_forward.1} parent=1 // pred_region
      %220 = vsyncadd [#allocation4], 0
      %s222 = sshll.u32 [#allocation10], 4
      %s223 = int_to_ptr.vmem [resolvable:$true] %s222
      %s224 = sshll.u32 %s7, 4
      %s225 = int_to_ptr.hbm [resolvable:$true] %s224
      %227 = dma.vmem_to_hbm [thread:$0]  %s223, 128, %s225, [#allocation4]
    $region49: #{_forward.1} parent=1 // pred_fallthru
      _
    // Predicated region
    $region50: #{_forward.1} parent=1 // pred_check
      _
    $region51: #{_forward.1} parent=1 // pred_check_branch
      %229 = sbr.rel (0) target = $region53
    $region52: #{_forward.1} parent=1 // pred_region
      %231 = dma.done [#allocation4], 128
    $region53: #{_forward.1} parent=1 // pred_fallthru
      _
    %232 = vsyncpa [#allocation3], 1
    %233 = vsyncpa [#allocation6], 1
    %234 = vsyncpa [#allocation9], 1
    %235 = vsyncpa [#allocation4], 1

</llo_original>
